<compile_context>
chip_gen: v5e
topology: v5e:2x2
jax: 0.10.0
libtpu: 0.0.40
codegen_flags: <defaults>
</compile_context>

<pallas_src>
import jax
import jax.numpy as jnp
from jax import lax
from jax.experimental import pallas as pl
from jax.experimental.pallas import tpu as pltpu

LN_EPS = 1e-5  # torch.nn.LayerNorm default


def _recon_head_kernel(x_ref, w1_ref, b1_ref, g_ref, beta_ref, w2_ref, b2_ref,
                       o_ref):
    # x_ref: (tm, d_in) tile of tokens; weights/biases are fully resident.
    x = x_ref[...]

    # linear1 on the MXU: native input dtype, f32 accumulation.
    h = jnp.dot(x, w1_ref[...], preferred_element_type=jnp.float32)
    h = h + b1_ref[...].astype(jnp.float32)

    # LayerNorm over the last dim in f32 (biased variance, like torch).
    mean = jnp.mean(h, axis=-1, keepdims=True)
    diff = h - mean
    var = jnp.mean(diff * diff, axis=-1, keepdims=True)
    hn = diff * lax.rsqrt(var + LN_EPS)
    hn = hn * g_ref[...].astype(jnp.float32) + beta_ref[...].astype(jnp.float32)

    # ReLU
    hn = jnp.maximum(hn, 0.0)

    # linear2 on the MXU: feed in the weight dtype (bf16-native if weights are
    # bf16), accumulate in f32.
    out = jnp.dot(hn.astype(w2_ref.dtype), w2_ref[...],
                  preferred_element_type=jnp.float32)
    out = out + b2_ref[...].astype(jnp.float32)
    o_ref[...] = out.astype(o_ref.dtype)


def _round_up(x, n):
    return ((x + n - 1) // n) * n


def reconstruction_head(x, params, *, tm=256):
    """x: (..., d_in) -> (..., d_out). Hot path runs inside a Pallas kernel.

    tm is the row tile; sweep {256, 512, 1024} on v6e, keep 256-512 on
    v5e/v7x (v7x: also keep grid length >= ~4 so both TensorCores get work).
    """
    w1, b1, gamma, beta, w2, b2 = params
    d_in = w1.shape[0]
    d_out = w2.shape[1]

    lead_shape = x.shape[:-1]
    xf = x.reshape(-1, d_in)
    m = xf.shape[0]

    # Sublane-aligned row tile; clamp so tiny inputs don't allocate huge tiles.
    sub = 16 if xf.dtype == jnp.bfloat16 else 8
    tm_eff = max(sub, min(_round_up(tm, sub), _round_up(m, sub)))
    grid = (pl.cdiv(m, tm_eff),)  # ragged last block handled by Pallas masking

    # Explicit VMEM budget: double-buffered x/out tiles + resident weights
    # (conservatively counted double-buffered) + f32 intermediates + headroom.
    xb = xf.dtype.itemsize
    wb = w1.dtype.itemsize
    vmem = 0
    vmem += 2 * tm_eff * d_in * xb                  # x tile, double buffered
    vmem += 2 * tm_eff * d_out * xb                 # out tile, double buffered
    vmem += 2 * (d_in * d_in + d_in * d_out) * wb   # W1, W2
    vmem += 2 * (3 * d_in + d_out) * wb             # b1, gamma, beta, b2
    vmem += 3 * tm_eff * d_in * 4                   # f32 h / hn intermediates
    vmem_limit = min(2 * vmem + (8 << 20), 60 << 20)

    out = pl.pallas_call(
        _recon_head_kernel,
        out_shape=jax.ShapeDtypeStruct((m, d_out), x.dtype),
        grid_spec=pltpu.PrefetchScalarGridSpec(
            num_scalar_prefetch=0,
            grid=grid,
            in_specs=[
                pl.BlockSpec((tm_eff, d_in), lambda i: (i, 0)),   # x tile
                pl.BlockSpec((d_in, d_in), lambda i: (0, 0)),     # W1^T (resident)
                pl.BlockSpec((1, d_in), lambda i: (0, 0)),        # b1
                pl.BlockSpec((1, d_in), lambda i: (0, 0)),        # ln gamma
                pl.BlockSpec((1, d_in), lambda i: (0, 0)),        # ln beta
                pl.BlockSpec((d_in, d_out), lambda i: (0, 0)),    # W2^T (resident)
                pl.BlockSpec((1, d_out), lambda i: (0, 0)),       # b2
            ],
            out_specs=pl.BlockSpec((tm_eff, d_out), lambda i: (i, 0)),
        ),
        compiler_params=pltpu.CompilerParams(
            dimension_semantics=("parallel",),
            vmem_limit_bytes=int(vmem_limit)),
    )(xf, w1, b1, gamma, beta, w2, b2)

    return out.reshape(*lead_shape, d_out)


def init_params(key, d_in, d_out, dtype=jnp.float32):
    """Deterministic synthetic params matching torch module shapes."""
    k1, k2, k3, k4 = jax.random.split(key, 4)
    lim1 = 1.0 / jnp.sqrt(d_in)
    # torch Linear stores weight as (out, in); we store transposed (in, out).
    w1 = jax.random.uniform(k1, (d_in, d_in), dtype, -lim1, lim1)
    b1 = jax.random.uniform(k2, (1, d_in), dtype, -lim1, lim1)
    w2 = jax.random.uniform(k3, (d_in, d_out), dtype, -lim1, lim1)
    b2 = jax.random.uniform(k4, (1, d_out), dtype, -lim1, lim1)
    gamma = jnp.ones((1, d_in), dtype)   # LayerNorm weight init
    beta = jnp.zeros((1, d_in), dtype)   # LayerNorm bias init
    return (w1, b1, gamma, beta, w2, b2)


def reference_forward(x, params):
    w1, b1, gamma, beta, w2, b2 = params
    h = jnp.dot(x, w1, precision=lax.Precision.HIGHEST) + b1
    mean = jnp.mean(h, axis=-1, keepdims=True)
    var = jnp.mean((h - mean) ** 2, axis=-1, keepdims=True)
    hn = (h - mean) / jnp.sqrt(var + LN_EPS) * gamma + beta
    hn = jnp.maximum(hn, 0.0)
    return jnp.dot(hn, w2, precision=lax.Precision.HIGHEST) + b2


if __name__ == "__main__":
    # Lane-dense feature dims (multiples of 128) per the perf review.
    B, S, D_IN, D_OUT = 2, 8, 256, 128
    key = jax.random.PRNGKey(0)
    kx, kp = jax.random.split(key)

    x = jax.random.normal(kx, (B, S, D_IN), jnp.float32)
    params = init_params(kp, D_IN, D_OUT)

    y = reconstruction_head(x, params)
    y = jax.block_until_ready(y)

    y_ref = reference_forward(x, params)
    assert y.shape == (B, S, D_OUT)
    assert jnp.allclose(y, y_ref, atol=2e-4, rtol=2e-4), "mismatch vs reference"

    print("KERNEL_OK")
</pallas_src>

<mosaic_0001>
module attributes {stable_mosaic.version = 11 : i64} {
  func.func @_recon_head_kernel(%arg0: i32, %arg1: memref<16x256xf32, #tpu.memory_space<vmem>>, %arg2: memref<256x256xf32, #tpu.memory_space<vmem>>, %arg3: memref<1x256xf32, #tpu.memory_space<vmem>>, %arg4: memref<1x256xf32, #tpu.memory_space<vmem>>, %arg5: memref<1x256xf32, #tpu.memory_space<vmem>>, %arg6: memref<256x128xf32, #tpu.memory_space<vmem>>, %arg7: memref<1x128xf32, #tpu.memory_space<vmem>>, %arg8: memref<16x128xf32, #tpu.memory_space<vmem>>) attributes {dimension_semantics = [#tpu.dimension_semantics<parallel>], iteration_bounds = array<i64: 1>, scalar_prefetch = 0 : i64, scratch_operands = 0 : i64, tpu.core_type = #tpu.core_type<tc>, window_params = [{transform_indices = @transform_0, window_bounds = array<i64: 16, 256>}, {pipeline_mode = #tpu.pipeline_mode<synchronous>, transform_indices = @transform_1, window_bounds = array<i64: 256, 256>}, {pipeline_mode = #tpu.pipeline_mode<synchronous>, transform_indices = @transform_2, window_bounds = array<i64: 1, 256>}, {pipeline_mode = #tpu.pipeline_mode<synchronous>, transform_indices = @transform_3, window_bounds = array<i64: 1, 256>}, {pipeline_mode = #tpu.pipeline_mode<synchronous>, transform_indices = @transform_4, window_bounds = array<i64: 1, 256>}, {pipeline_mode = #tpu.pipeline_mode<synchronous>, transform_indices = @transform_5, window_bounds = array<i64: 256, 128>}, {pipeline_mode = #tpu.pipeline_mode<synchronous>, transform_indices = @transform_6, window_bounds = array<i64: 1, 128>}, {transform_indices = @transform_7, window_bounds = array<i64: 16, 128>}]} {
    %c0 = arith.constant 0 : index
    %c0_0 = arith.constant 0 : index
    %0 = vector.load %arg1[%c0, %c0_0] : memref<16x256xf32, #tpu.memory_space<vmem>>, vector<16x256xf32>
    %c0_1 = arith.constant 0 : index
    %c0_2 = arith.constant 0 : index
    %1 = vector.load %arg2[%c0_1, %c0_2] : memref<256x256xf32, #tpu.memory_space<vmem>>, vector<256x256xf32>
    %cst = arith.constant dense<0.000000e+00> : vector<16x256xf32>
    %2 = tpu.matmul %0, %1, %cst {dimension_numbers = #tpu.dot_dimension_numbers<[1], [0], [0], [1], [0, 0, 1, 1], [], []>} : vector<16x256xf32>, vector<256x256xf32>, vector<16x256xf32> -> vector<16x256xf32>
    %c0_3 = arith.constant 0 : index
    %c0_4 = arith.constant 0 : index
    %3 = vector.load %arg3[%c0_3, %c0_4] : memref<1x256xf32, #tpu.memory_space<vmem>>, vector<1x256xf32>
    %4 = vector.broadcast %3 : vector<1x256xf32> to vector<16x256xf32>
    %5 = arith.addf %2, %4 : vector<16x256xf32>
    %cst_5 = arith.constant dense<0.000000e+00> : vector<16xf32>
    %6 = vector.multi_reduction <add>, %5, %cst_5 [1] : vector<16x256xf32> to vector<16xf32>
    %7 = vector.shape_cast %6 : vector<16xf32> to vector<16x1xf32>
    %cst_6 = arith.constant 2.560000e+02 : f32
    %8 = vector.broadcast %cst_6 : f32 to vector<16x1xf32>
    %9 = arith.divf %7, %8 : vector<16x1xf32>
    %10 = vector.broadcast %9 : vector<16x1xf32> to vector<16x256xf32>
    %11 = arith.subf %5, %10 : vector<16x256xf32>
    %12 = arith.mulf %11, %11 : vector<16x256xf32>
    %cst_7 = arith.constant dense<0.000000e+00> : vector<16xf32>
    %13 = vector.multi_reduction <add>, %12, %cst_7 [1] : vector<16x256xf32> to vector<16xf32>
    %14 = vector.shape_cast %13 : vector<16xf32> to vector<16x1xf32>
    %cst_8 = arith.constant 2.560000e+02 : f32
    %15 = vector.broadcast %cst_8 : f32 to vector<16x1xf32>
    %16 = arith.divf %14, %15 : vector<16x1xf32>
    %cst_9 = arith.constant 9.99999974E-6 : f32
    %17 = vector.broadcast %cst_9 : f32 to vector<16x1xf32>
    %18 = arith.addf %16, %17 : vector<16x1xf32>
    %19 = math.rsqrt %18 : vector<16x1xf32>
    %20 = vector.broadcast %19 : vector<16x1xf32> to vector<16x256xf32>
    %21 = arith.mulf %11, %20 : vector<16x256xf32>
    %c0_10 = arith.constant 0 : index
    %c0_11 = arith.constant 0 : index
    %22 = vector.load %arg4[%c0_10, %c0_11] : memref<1x256xf32, #tpu.memory_space<vmem>>, vector<1x256xf32>
    %23 = vector.broadcast %22 : vector<1x256xf32> to vector<16x256xf32>
    %24 = arith.mulf %21, %23 : vector<16x256xf32>
    %c0_12 = arith.constant 0 : index
    %c0_13 = arith.constant 0 : index
    %25 = vector.load %arg5[%c0_12, %c0_13] : memref<1x256xf32, #tpu.memory_space<vmem>>, vector<1x256xf32>
    %26 = vector.broadcast %25 : vector<1x256xf32> to vector<16x256xf32>
    %27 = arith.addf %24, %26 : vector<16x256xf32>
    %cst_14 = arith.constant 0.000000e+00 : f32
    %28 = vector.broadcast %cst_14 : f32 to vector<16x256xf32>
    %29 = arith.maximumf %27, %28 : vector<16x256xf32>
    %c0_15 = arith.constant 0 : index
    %c0_16 = arith.constant 0 : index
    %30 = vector.load %arg6[%c0_15, %c0_16] : memref<256x128xf32, #tpu.memory_space<vmem>>, vector<256x128xf32>
    %cst_17 = arith.constant dense<0.000000e+00> : vector<16x128xf32>
    %31 = tpu.matmul %29, %30, %cst_17 {dimension_numbers = #tpu.dot_dimension_numbers<[1], [0], [0], [1], [0, 0, 1, 1], [], []>} : vector<16x256xf32>, vector<256x128xf32>, vector<16x128xf32> -> vector<16x128xf32>
    %c0_18 = arith.constant 0 : index
    %c0_19 = arith.constant 0 : index
    %32 = vector.load %arg7[%c0_18, %c0_19] : memref<1x128xf32, #tpu.memory_space<vmem>>, vector<1x128xf32>
    %33 = vector.broadcast %32 : vector<1x128xf32> to vector<16x128xf32>
    %34 = arith.addf %31, %33 : vector<16x128xf32>
    %c0_20 = arith.constant 0 : index
    %c0_21 = arith.constant 0 : index
    %35 = vector.load %arg8[%c0_20, %c0_21] : memref<16x128xf32, #tpu.memory_space<vmem>>, vector<16x128xf32>
    tpu.vector_store %arg8[%c0_20, %c0_21], %34 {strides = array<i32>} : memref<16x128xf32, #tpu.memory_space<vmem>>, vector<16x128xf32>,
    return
  }
  func.func @transform_0(%arg0: i32) -> (i32, i32) {
    %c0_i32 = arith.constant 0 : i32
    %c0_i32_0 = arith.constant 0 : i32
    return %arg0, %c0_i32 : i32, i32
  }
  func.func @transform_1(%arg0: i32) -> (i32, i32) {
    %c0_i32 = arith.constant 0 : i32
    %c0_i32_0 = arith.constant 0 : i32
    %c0_i32_1 = arith.constant 0 : i32
    return %c0_i32, %c0_i32_0 : i32, i32
  }
  func.func @transform_2(%arg0: i32) -> (i32, i32) {
    %c0_i32 = arith.constant 0 : i32
    %c0_i32_0 = arith.constant 0 : i32
    %c0_i32_1 = arith.constant 0 : i32
    return %c0_i32, %c0_i32_0 : i32, i32
  }
  func.func @transform_3(%arg0: i32) -> (i32, i32) {
    %c0_i32 = arith.constant 0 : i32
    %c0_i32_0 = arith.constant 0 : i32
    %c0_i32_1 = arith.constant 0 : i32
    return %c0_i32, %c0_i32_0 : i32, i32
  }
  func.func @transform_4(%arg0: i32) -> (i32, i32) {
    %c0_i32 = arith.constant 0 : i32
    %c0_i32_0 = arith.constant 0 : i32
    %c0_i32_1 = arith.constant 0 : i32
    return %c0_i32, %c0_i32_0 : i32, i32
  }
  func.func @transform_5(%arg0: i32) -> (i32, i32) {
    %c0_i32 = arith.constant 0 : i32
    %c0_i32_0 = arith.constant 0 : i32
    %c0_i32_1 = arith.constant 0 : i32
    return %c0_i32, %c0_i32_0 : i32, i32
  }
  func.func @transform_6(%arg0: i32) -> (i32, i32) {
    %c0_i32 = arith.constant 0 : i32
    %c0_i32_0 = arith.constant 0 : i32
    %c0_i32_1 = arith.constant 0 : i32
    return %c0_i32, %c0_i32_0 : i32, i32
  }
  func.func @transform_7(%arg0: i32) -> (i32, i32) {
    %c0_i32 = arith.constant 0 : i32
    %c0_i32_0 = arith.constant 0 : i32
    return %arg0, %c0_i32 : i32, i32
  }
}

</mosaic_0001>

<llo_original>
// kernel: tpu_custom_call.1
$region0: #{tpu_custom_call.1}
  #allocation0 [shape = 'u32[]', space=smem, size = 0x4, offset = 0x4, fixed_abs, tag = 'smem constant byte address 0x4 - core index']
  #allocation1 [shape = 'u32[72,128]{1,0:T(1,128)}', space=vmem, size = 0x9000, scoped, tag = 'internal scratch']
  %s0 = inlined_call_operand.hbm [shape: f32[16,256], index: 0, kind: input, shape index: {}]
  %s1 = inlined_call_operand.hbm [shape: f32[256,256], index: 1, kind: input, shape index: {}]
  %s2 = inlined_call_operand.hbm [shape: f32[1,256], index: 2, kind: input, shape index: {}]
  %s3 = inlined_call_operand.vmem [shape: f32[1,256], index: 3, kind: input, shape index: {}]
  %s4 = inlined_call_operand.hbm [shape: f32[1,256], index: 4, kind: input, shape index: {}]
  %s5 = inlined_call_operand.hbm [shape: f32[256,128], index: 5, kind: input, shape index: {}]
  %s6 = inlined_call_operand.vmem [shape: f32[1,128], index: 6, kind: input, shape index: {}]
  %s7 = inlined_call_operand.hbm [shape: f32[16,128], index: 7, kind: output, shape index: {}]
  %s8 = sld [smem:[#allocation0]]
  $region58: #{tpu_custom_call.1} parent=0
    _
  %s10 = ssub.s32 1, %s8
  %s11 = scalar_select 0, %s10, %s8
  $region1: #{tpu_custom_call.1} parent=0
    #allocation2 [shape = 'u8[16384]{0}', space=vmem, size = 0x4000, scoped, tag = 'input window, operand 0, single buffered']
    #allocation3 [shape = 's32[1]{0}', space=sflag, size = 0x4, scoped, tag = 'scoped memory for tpu_custom_call.1']
    #allocation4 [shape = 's32[1]{0}', space=sflag, size = 0x4, scoped, tag = 'scoped memory for tpu_custom_call.1']
    #allocation5 [shape = 'u8[262144]{0}', space=vmem, size = 0x40000, scoped, tag = 'input window, operand 1, single buffered']
    #allocation6 [shape = 's32[1]{0}', space=sflag, size = 0x4, scoped, tag = 'scoped memory for tpu_custom_call.1']
    #allocation7 [shape = 'u8[1024]{0}', space=vmem, size = 0x400, scoped, tag = 'input window, operand 2, single buffered']
    #allocation8 [shape = 'u8[1024]{0}', space=vmem, size = 0x400, scoped, tag = 'input window, operand 4, single buffered']
    #allocation9 [shape = 's32[1]{0}', space=sflag, size = 0x4, scoped, tag = 'scoped memory for tpu_custom_call.1']
    #allocation10 [shape = 'u8[131072]{0}', space=vmem, size = 0x20000, scoped, tag = 'input window, operand 5, single buffered']
    #allocation11 [shape = 'u8[8192]{0}', space=vmem, size = 0x2000, scoped, tag = 'output window, operand 0, single buffered']
    %12 = vsyncpa [#allocation3], 0
    %13 = vsyncpa [#allocation6], 0
    %14 = vsyncpa [#allocation9], 0
    %15 = vsyncpa [#allocation4], 0
    // Predicated region
    $region2: #{tpu_custom_call.1} parent=1 // pred_check
      _
    $region3: #{tpu_custom_call.1} parent=1 // pred_check_branch
      %17 = sbr.rel (0) target = $region5
    $region4: #{tpu_custom_call.1} parent=1 // pred_region
      %19 = vsyncadd [#allocation3], 0
      %s20 = sshll.u32 %s0, 4
      %s21 = int_to_ptr.hbm [resolvable:$true] %s20
      %s22 = sshll.u32 [#allocation2], 4
      %s23 = int_to_ptr.vmem [resolvable:$true] %s22
      %28 = dma.hbm_to_vmem [thread:$0]  %s21, 512, %s23, [#allocation3], 256, 256, 16
    $region5: #{tpu_custom_call.1} parent=1 // pred_fallthru
      _
    // Predicated region
    $region6: #{tpu_custom_call.1} parent=1 // pred_check
      _
    $region7: #{tpu_custom_call.1} parent=1 // pred_check_branch
      %30 = sbr.rel (0) target = $region9
    $region8: #{tpu_custom_call.1} parent=1 // pred_region
      %32 = vsyncadd [#allocation6], 0
      %s33 = sshll.u32 %s1, 4
      %s34 = int_to_ptr.hbm [resolvable:$true] %s33
      %s35 = sshll.u32 [#allocation5], 4
      %s36 = int_to_ptr.vmem [resolvable:$true] %s35
      %41 = dma.hbm_to_vmem [thread:$0]  %s34, 8192, %s36, [#allocation6], 256, 256, 16
    $region9: #{tpu_custom_call.1} parent=1 // pred_fallthru
      _
    // Predicated region
    $region10: #{tpu_custom_call.1} parent=1 // pred_check
      _
    $region11: #{tpu_custom_call.1} parent=1 // pred_check_branch
      %43 = sbr.rel (0) target = $region13
    $region12: #{tpu_custom_call.1} parent=1 // pred_region
      %45 = vsyncadd [#allocation6], 0
      %s47 = sshll.u32 %s2, 4
      %s48 = int_to_ptr.hbm [resolvable:$true] %s47
      %s49 = sshll.u32 [#allocation7], 4
      %s50 = int_to_ptr.vmem [resolvable:$true] %s49
      %52 = dma.hbm_to_vmem [thread:$0]  %s48, 32, %s50, [#allocation6]
    $region13: #{tpu_custom_call.1} parent=1 // pred_fallthru
      _
    // Predicated region
    $region14: #{tpu_custom_call.1} parent=1 // pred_check
      _
    $region15: #{tpu_custom_call.1} parent=1 // pred_check_branch
      %54 = sbr.rel (0) target = $region17
    $region16: #{tpu_custom_call.1} parent=1 // pred_region
      _
    $region17: #{tpu_custom_call.1} parent=1 // pred_fallthru
      _
    // Predicated region
    $region18: #{tpu_custom_call.1} parent=1 // pred_check
      _
    $region19: #{tpu_custom_call.1} parent=1 // pred_check_branch
      %56 = sbr.rel (0) target = $region21
    $region20: #{tpu_custom_call.1} parent=1 // pred_region
      %58 = vsyncadd [#allocation9], 0
      %s60 = sshll.u32 %s4, 4
      %s61 = int_to_ptr.hbm [resolvable:$true] %s60
      %s62 = sshll.u32 [#allocation8], 4
      %s63 = int_to_ptr.vmem [resolvable:$true] %s62
      %65 = dma.hbm_to_vmem [thread:$0]  %s61, 32, %s63, [#allocation9]
    $region21: #{tpu_custom_call.1} parent=1 // pred_fallthru
      _
    // Predicated region
    $region22: #{tpu_custom_call.1} parent=1 // pred_check
      _
    $region23: #{tpu_custom_call.1} parent=1 // pred_check_branch
      %67 = sbr.rel (0) target = $region25
    $region24: #{tpu_custom_call.1} parent=1 // pred_region
      %69 = vsyncadd [#allocation9], 0
      %s70 = sshll.u32 %s5, 4
      %s71 = int_to_ptr.hbm [resolvable:$true] %s70
      %s72 = sshll.u32 [#allocation10], 4
      %s73 = int_to_ptr.vmem [resolvable:$true] %s72
      %78 = dma.hbm_to_vmem [thread:$0]  %s71, 4096, %s73, [#allocation9], 128, 128, 8
    $region25: #{tpu_custom_call.1} parent=1 // pred_fallthru
      _
    // Predicated region
    $region26: #{tpu_custom_call.1} parent=1 // pred_check
      _
    $region27: #{tpu_custom_call.1} parent=1 // pred_check_branch
      %80 = sbr.rel (0) target = $region29
    $region28: #{tpu_custom_call.1} parent=1 // pred_region
      _
    $region29: #{tpu_custom_call.1} parent=1 // pred_fallthru
      _
    // Predicated region
    $region30: #{tpu_custom_call.1} parent=1 // pred_check
      _
    $region31: #{tpu_custom_call.1} parent=1 // pred_check_branch
      %82 = sbr.rel (0) target = $region33
    $region32: #{tpu_custom_call.1} parent=1 // pred_region
      %84 = dma.done [#allocation3], 512
    $region33: #{tpu_custom_call.1} parent=1 // pred_fallthru
      _
    // Predicated region
    $region34: #{tpu_custom_call.1} parent=1 // pred_check
      _
    $region35: #{tpu_custom_call.1} parent=1 // pred_check_branch
      %86 = sbr.rel (0) target = $region37
    $region36: #{tpu_custom_call.1} parent=1 // pred_region
      %88 = dma.done [#allocation6], 8192
    $region37: #{tpu_custom_call.1} parent=1 // pred_fallthru
      _
    // Predicated region
    $region38: #{tpu_custom_call.1} parent=1 // pred_check
      _
    $region39: #{tpu_custom_call.1} parent=1 // pred_check_branch
      %90 = sbr.rel (0) target = $region41
    $region40: #{tpu_custom_call.1} parent=1 // pred_region
      %92 = dma.done [#allocation6], 32
    $region41: #{tpu_custom_call.1} parent=1 // pred_fallthru
      _
    // Predicated region
    $region42: #{tpu_custom_call.1} parent=1 // pred_check
      _
    $region43: #{tpu_custom_call.1} parent=1 // pred_check_branch
      %94 = sbr.rel (0) target = $region45
    $region44: #{tpu_custom_call.1} parent=1 // pred_region
      %96 = dma.done [#allocation9], 32
    $region45: #{tpu_custom_call.1} parent=1 // pred_fallthru
      _
    // Predicated region
    $region46: #{tpu_custom_call.1} parent=1 // pred_check
      _
    $region47: #{tpu_custom_call.1} parent=1 // pred_check_branch
      %98 = sbr.rel (0) target = $region49
    $region48: #{tpu_custom_call.1} parent=1 // pred_region
      %100 = dma.done [#allocation9], 4096
    $region49: #{tpu_custom_call.1} parent=1 // pred_fallthru
      _
    %v101 = vld [vmem:[#allocation2] sm:$0xff]
    %v102 = vld [vmem:[#allocation2 + $0x8] sm:$0xff]
    %v103 = vld [vmem:[#allocation2 + $0x10] sm:$0xff]
    %v104 = vld [vmem:[#allocation2 + $0x18] sm:$0xff]
    %v105 = vld [vmem:[#allocation5] sm:$0xff]
    %v106 = vld [vmem:[#allocation5 + $0x8] sm:$0xff]
    %v107 = vld [vmem:[#allocation5 + $0x10] sm:$0xff]
    %v108 = vld [vmem:[#allocation5 + $0x18] sm:$0xff]
    %v109 = vld [vmem:[#allocation5 + $0x20] sm:$0xff]
    %v110 = vld [vmem:[#allocation5 + $0x28] sm:$0xff]
    %v111 = vld [vmem:[#allocation5 + $0x30] sm:$0xff]
    %v112 = vld [vmem:[#allocation5 + $0x38] sm:$0xff]
    %v113 = vld [vmem:[#allocation5 + $0x40] sm:$0xff]
    %v114 = vld [vmem:[#allocation5 + $0x48] sm:$0xff]
    %v115 = vld [vmem:[#allocation5 + $0x50] sm:$0xff]
    %v116 = vld [vmem:[#allocation5 + $0x58] sm:$0xff]
    %v117 = vld [vmem:[#allocation5 + $0x60] sm:$0xff]
    %v118 = vld [vmem:[#allocation5 + $0x68] sm:$0xff]
    %v119 = vld [vmem:[#allocation5 + $0x70] sm:$0xff]
    %v120 = vld [vmem:[#allocation5 + $0x78] sm:$0xff]
    %v121 = vld [vmem:[#allocation5 + $0x80] sm:$0xff]
    %v122 = vld [vmem:[#allocation5 + $0x88] sm:$0xff]
    %v123 = vld [vmem:[#allocation5 + $0x90] sm:$0xff]
    %v124 = vld [vmem:[#allocation5 + $0x98] sm:$0xff]
    %v125 = vld [vmem:[#allocation5 + $0xa0] sm:$0xff]
    %v126 = vld [vmem:[#allocation5 + $0xa8] sm:$0xff]
    %v127 = vld [vmem:[#allocation5 + $0xb0] sm:$0xff]
    %v128 = vld [vmem:[#allocation5 + $0xb8] sm:$0xff]
    %v129 = vld [vmem:[#allocation5 + $0xc0] sm:$0xff]
    %v130 = vld [vmem:[#allocation5 + $0xc8] sm:$0xff]
    %v131 = vld [vmem:[#allocation5 + $0xd0] sm:$0xff]
    %v132 = vld [vmem:[#allocation5 + $0xd8] sm:$0xff]
    %v133 = vld [vmem:[#allocation5 + $0xe0] sm:$0xff]
    %v134 = vld [vmem:[#allocation5 + $0xe8] sm:$0xff]
    %v135 = vld [vmem:[#allocation5 + $0xf0] sm:$0xff]
    %v136 = vld [vmem:[#allocation5 + $0xf8] sm:$0xff]
    %v137 = vld [vmem:[#allocation5 + $0x100] sm:$0xff]
    %v138 = vld [vmem:[#allocation5 + $0x108] sm:$0xff]
    %v139 = vld [vmem:[#allocation5 + $0x110] sm:$0xff]
    %v140 = vld [vmem:[#allocation5 + $0x118] sm:$0xff]
    %v141 = vld [vmem:[#allocation5 + $0x120] sm:$0xff]
    %v142 = vld [vmem:[#allocation5 + $0x128] sm:$0xff]
    %v143 = vld [vmem:[#allocation5 + $0x130] sm:$0xff]
    %v144 = vld [vmem:[#allocation5 + $0x138] sm:$0xff]
    %v145 = vld [vmem:[#allocation5 + $0x140] sm:$0xff]
    %v146 = vld [vmem:[#allocation5 + $0x148] sm:$0xff]
    %v147 = vld [vmem:[#allocation5 + $0x150] sm:$0xff]
    %v148 = vld [vmem:[#allocation5 + $0x158] sm:$0xff]
    %v149 = vld [vmem:[#allocation5 + $0x160] sm:$0xff]
    %v150 = vld [vmem:[#allocation5 + $0x168] sm:$0xff]
    %v151 = vld [vmem:[#allocation5 + $0x170] sm:$0xff]
    %v152 = vld [vmem:[#allocation5 + $0x178] sm:$0xff]
    %v153 = vld [vmem:[#allocation5 + $0x180] sm:$0xff]
    %v154 = vld [vmem:[#allocation5 + $0x188] sm:$0xff]
    %v155 = vld [vmem:[#allocation5 + $0x190] sm:$0xff]
    %v156 = vld [vmem:[#allocation5 + $0x198] sm:$0xff]
    %v157 = vld [vmem:[#allocation5 + $0x1a0] sm:$0xff]
    %v158 = vld [vmem:[#allocation5 + $0x1a8] sm:$0xff]
    %v159 = vld [vmem:[#allocation5 + $0x1b0] sm:$0xff]
    %v160 = vld [vmem:[#allocation5 + $0x1b8] sm:$0xff]
    %v161 = vld [vmem:[#allocation5 + $0x1c0] sm:$0xff]
    %v162 = vld [vmem:[#allocation5 + $0x1c8] sm:$0xff]
    %v163 = vld [vmem:[#allocation5 + $0x1d0] sm:$0xff]
    %v164 = vld [vmem:[#allocation5 + $0x1d8] sm:$0xff]
    %v165 = vld [vmem:[#allocation5 + $0x1e0] sm:$0xff]
    %v166 = vld [vmem:[#allocation5 + $0x1e8] sm:$0xff]
    %v167 = vld [vmem:[#allocation5 + $0x1f0] sm:$0xff]
    %v168 = vld [vmem:[#allocation5 + $0x1f8] sm:$0xff]
    %v169 = vld [vmem:[#allocation7] sm:$0x3]
    %v171 = vperm.slane %v169, 0
    %v172 = vperm.slane %v169, 1
    %175 = vmatpush.msra.mxu0 %v135
    %176 = vmatpush.msra.mxu0 %v133
    %177 = vmatpush.msra.mxu0 %v131
    %178 = vmatpush.msra.mxu0 %v129
    %179 = vmatpush.msra.mxu0 %v127
    %180 = vmatpush.msra.mxu0 %v125
    %181 = vmatpush.msra.mxu0 %v123
    %182 = vmatpush.msra.mxu0 %v121
    %183 = vmatpush.msra.mxu0 %v119
    %184 = vmatpush.msra.mxu0 %v117
    %185 = vmatpush.msra.mxu0 %v115
    %186 = vmatpush.msra.mxu0 %v113
    %187 = vmatpush.msra.mxu0 %v111
    %188 = vmatpush.msra.mxu0 %v109
    %189 = vmatpush.msra.mxu0 %v107
    %190 = vmatpush.msra.mxu0 %v105
    %191 = vmatmul.f32.gmra.mxu0 %v101
    %v192 = vpop.f32.mrf.mxu0
    %v193 = vadd.f32 %v171, %v192
    %194 = vmatmul.f32.gmra.mxu0 %v103
    %v195 = vpop.f32.mrf.mxu0
    %v196 = vadd.f32 %v171, %v195
    %197 = vdwg.mxu0
    %198 = vmatpush.msra.mxu0 %v167
    %199 = vmatpush.msra.mxu0 %v165
    %200 = vmatpush.msra.mxu0 %v163
    %201 = vmatpush.msra.mxu0 %v161
    %202 = vmatpush.msra.mxu0 %v159
    %203 = vmatpush.msra.mxu0 %v157
    %204 = vmatpush.msra.mxu0 %v155
    %205 = vmatpush.msra.mxu0 %v153
    %206 = vmatpush.msra.mxu0 %v151
    %207 = vmatpush.msra.mxu0 %v149
    %208 = vmatpush.msra.mxu0 %v147
    %209 = vmatpush.msra.mxu0 %v145
    %210 = vmatpush.msra.mxu0 %v143
    %211 = vmatpush.msra.mxu0 %v141
    %212 = vmatpush.msra.mxu0 %v139
    %213 = vmatpush.msra.mxu0 %v137
    %214 = vmatmul.f32.gmra.mxu0 %v102
    %v215 = vpop.f32.mrf.mxu0
    %v216 = vadd.f32 %v193, %v215
    %217 = vmatmul.f32.gmra.mxu0 %v104
    %v218 = vpop.f32.mrf.mxu0
    %v219 = vadd.f32 %v196, %v218
    %220 = vdwg.mxu0
    %221 = vmatpush.msra.mxu0 %v136
    %222 = vmatpush.msra.mxu0 %v134
    %223 = vmatpush.msra.mxu0 %v132
    %224 = vmatpush.msra.mxu0 %v130
    %225 = vmatpush.msra.mxu0 %v128
    %226 = vmatpush.msra.mxu0 %v126
    %227 = vmatpush.msra.mxu0 %v124
    %228 = vmatpush.msra.mxu0 %v122
    %229 = vmatpush.msra.mxu0 %v120
    %230 = vmatpush.msra.mxu0 %v118
    %231 = vmatpush.msra.mxu0 %v116
    %232 = vmatpush.msra.mxu0 %v114
    %233 = vmatpush.msra.mxu0 %v112
    %234 = vmatpush.msra.mxu0 %v110
    %235 = vmatpush.msra.mxu0 %v108
    %236 = vmatpush.msra.mxu0 %v106
    %237 = vmatmul.f32.gmra.mxu0 %v101
    %v238 = vpop.f32.mrf.mxu0
    %v239 = vadd.f32 %v172, %v238
    %240 = vmatmul.f32.gmra.mxu0 %v103
    %v241 = vpop.f32.mrf.mxu0
    %v242 = vadd.f32 %v172, %v241
    %243 = vdwg.mxu0
    %244 = vmatpush.msra.mxu0 %v168
    %245 = vmatpush.msra.mxu0 %v166
    %246 = vmatpush.msra.mxu0 %v164
    %247 = vmatpush.msra.mxu0 %v162
    %248 = vmatpush.msra.mxu0 %v160
    %249 = vmatpush.msra.mxu0 %v158
    %250 = vmatpush.msra.mxu0 %v156
    %251 = vmatpush.msra.mxu0 %v154
    %252 = vmatpush.msra.mxu0 %v152
    %253 = vmatpush.msra.mxu0 %v150
    %254 = vmatpush.msra.mxu0 %v148
    %255 = vmatpush.msra.mxu0 %v146
    %256 = vmatpush.msra.mxu0 %v144
    %257 = vmatpush.msra.mxu0 %v142
    %258 = vmatpush.msra.mxu0 %v140
    %259 = vmatpush.msra.mxu0 %v138
    %260 = vmatmul.f32.gmra.mxu0 %v102
    %v261 = vpop.f32.mrf.mxu0
    %v262 = vadd.f32 %v239, %v261
    %263 = vmatmul.f32.gmra.mxu0 %v104
    %v264 = vpop.f32.mrf.mxu0
    %v265 = vadd.f32 %v242, %v264
    %266 = vdwg.mxu0
    %v267 = vadd.f32 %v216, %v262
    %268 = vadd.xlane.f32.xlu0 %v267
    %v269 = vpop.xlane.xlu0 %268
    %v270 = vadd.f32 %v219, %v265
    %271 = vadd.xlane.f32.xlu0 %v270
    %v272 = vpop.xlane.xlu0 %271
    %v273 = vrcp.pop 256.0
    %v274 = vmul.f32 256.0, %v273
    %v275 = vsub.f32 1.0, %v274
    %v276 = vmul.f32 %v273, %v275
    %v277 = vadd.f32 %v273, %v276
    %vm278 = vweird.f32 %v273
    %v279 = vsel %vm278, %v273, %v277
    %v280 = vmul.f32 %v269, %v279
    %v281 = vmul.f32 %v272, %v279
    %v282 = vsub.f32 %v216, %v280
    %v283 = vsub.f32 %v262, %v280
    %v284 = vsub.f32 %v219, %v281
    %v285 = vsub.f32 %v265, %v281
    %v286 = vmul.f32 %v282, %v282
    %v287 = vmul.f32 %v283, %v283
    %v288 = vmul.f32 %v284, %v284
    %v289 = vmul.f32 %v285, %v285
    %v290 = vadd.f32 %v286, %v287
    %291 = vadd.xlane.f32.xlu0 %v290
    %v292 = vpop.xlane.xlu0 %291
    %v293 = vadd.f32 %v288, %v289
    %294 = vadd.xlane.f32.xlu0 %v293
    %v295 = vpop.xlane.xlu0 %294
    %v296 = vmul.f32 %v292, %v279
    %v297 = vmul.f32 %v295, %v279
    %v298 = vadd.f32 %v296, 1e-05
    %v299 = vadd.f32 %v297, 1e-05
    %v300 = vrsqrt.pop %v298
    %v301 = vmul.f32 %v300, %v298
    %v302 = vmul.f32 %v301, %v300
    %v303 = vmul.f32 0.5, %v302
    %v304 = vsub.f32 1.5, %v303
    %v305 = vmul.f32 %v300, %v304
    %vm306 = vweird.f32 %v298
    %vm307 = vweird.f32 %v300
    %vm308 = vmor %vm306, %vm307
    %v309 = vsel %vm308, %v300, %v305
    %v310 = vrsqrt.pop %v299
    %v311 = vmul.f32 %v310, %v299
    %v312 = vmul.f32 %v311, %v310
    %v313 = vmul.f32 0.5, %v312
    %v314 = vsub.f32 1.5, %v313
    %v315 = vmul.f32 %v310, %v314
    %vm316 = vweird.f32 %v299
    %vm317 = vweird.f32 %v310
    %vm318 = vmor %vm316, %vm317
    %v319 = vsel %vm318, %v310, %v315
    %v320 = vmul.f32 %v282, %v309
    %v321 = vmul.f32 %v283, %v309
    %v322 = vmul.f32 %v284, %v319
    %v323 = vmul.f32 %v285, %v319
    %v324 = vld [vmem:[%s3] sm:$0x3]
    %v326 = vperm.slane %v324, 0
    %v327 = vperm.slane %v324, 1
    %v330 = vmul.f32 %v320, %v326
    %v331 = vmul.f32 %v321, %v327
    %v332 = vmul.f32 %v322, %v326
    %v333 = vmul.f32 %v323, %v327
    %v334 = vld [vmem:[#allocation8] sm:$0x3]
    %v336 = vperm.slane %v334, 0
    %v337 = vperm.slane %v334, 1
    %v340 = vadd.f32 %v330, %v336
    %v341 = vadd.f32 %v331, %v337
    %v342 = vadd.f32 %v332, %v336
    %v343 = vadd.f32 %v333, %v337
    %v344 = vmax.f32 %v340, 0.0
    %v345 = vmax.f32 %v341, 0.0
    %v346 = vmax.f32 %v342, 0.0
    %v347 = vmax.f32 %v343, 0.0
    %v348 = vld [vmem:[#allocation10] sm:$0xff]
    %v349 = vld [vmem:[#allocation10 + $0x8] sm:$0xff]
    %v350 = vld [vmem:[#allocation10 + $0x10] sm:$0xff]
    %v351 = vld [vmem:[#allocation10 + $0x18] sm:$0xff]
    %v352 = vld [vmem:[#allocation10 + $0x20] sm:$0xff]
    %v353 = vld [vmem:[#allocation10 + $0x28] sm:$0xff]
    %v354 = vld [vmem:[#allocation10 + $0x30] sm:$0xff]
    %v355 = vld [vmem:[#allocation10 + $0x38] sm:$0xff]
    %v356 = vld [vmem:[#allocation10 + $0x40] sm:$0xff]
    %v357 = vld [vmem:[#allocation10 + $0x48] sm:$0xff]
    %v358 = vld [vmem:[#allocation10 + $0x50] sm:$0xff]
    %v359 = vld [vmem:[#allocation10 + $0x58] sm:$0xff]
    %v360 = vld [vmem:[#allocation10 + $0x60] sm:$0xff]
    %v361 = vld [vmem:[#allocation10 + $0x68] sm:$0xff]
    %v362 = vld [vmem:[#allocation10 + $0x70] sm:$0xff]
    %v363 = vld [vmem:[#allocation10 + $0x78] sm:$0xff]
    %v364 = vld [vmem:[#allocation10 + $0x80] sm:$0xff]
    %v365 = vld [vmem:[#allocation10 + $0x88] sm:$0xff]
    %v366 = vld [vmem:[#allocation10 + $0x90] sm:$0xff]
    %v367 = vld [vmem:[#allocation10 + $0x98] sm:$0xff]
    %v368 = vld [vmem:[#allocation10 + $0xa0] sm:$0xff]
    %v369 = vld [vmem:[#allocation10 + $0xa8] sm:$0xff]
    %v370 = vld [vmem:[#allocation10 + $0xb0] sm:$0xff]
    %v371 = vld [vmem:[#allocation10 + $0xb8] sm:$0xff]
    %v372 = vld [vmem:[#allocation10 + $0xc0] sm:$0xff]
    %v373 = vld [vmem:[#allocation10 + $0xc8] sm:$0xff]
    %v374 = vld [vmem:[#allocation10 + $0xd0] sm:$0xff]
    %v375 = vld [vmem:[#allocation10 + $0xd8] sm:$0xff]
    %v376 = vld [vmem:[#allocation10 + $0xe0] sm:$0xff]
    %v377 = vld [vmem:[#allocation10 + $0xe8] sm:$0xff]
    %v378 = vld [vmem:[#allocation10 + $0xf0] sm:$0xff]
    %v379 = vld [vmem:[#allocation10 + $0xf8] sm:$0xff]
    %v380 = vld [vmem:[%s6] sm:$0x1]
    %v382 = vperm.slane %v380, 0
    %384 = vmatpush.msra.mxu0 %v363
    %385 = vmatpush.msra.mxu0 %v362
    %386 = vmatpush.msra.mxu0 %v361
    %387 = vmatpush.msra.mxu0 %v360
    %388 = vmatpush.msra.mxu0 %v359
    %389 = vmatpush.msra.mxu0 %v358
    %390 = vmatpush.msra.mxu0 %v357
    %391 = vmatpush.msra.mxu0 %v356
    %392 = vmatpush.msra.mxu0 %v355
    %393 = vmatpush.msra.mxu0 %v354
    %394 = vmatpush.msra.mxu0 %v353
    %395 = vmatpush.msra.mxu0 %v352
    %396 = vmatpush.msra.mxu0 %v351
    %397 = vmatpush.msra.mxu0 %v350
    %398 = vmatpush.msra.mxu0 %v349
    %399 = vmatpush.msra.mxu0 %v348
    %400 = vmatmul.f32.gmra.mxu0 %v344
    %v401 = vpop.f32.mrf.mxu0
    %v402 = vadd.f32 %v382, %v401
    %403 = vmatmul.f32.gmra.mxu0 %v346
    %v404 = vpop.f32.mrf.mxu0
    %v405 = vadd.f32 %v382, %v404
    %406 = vdwg.mxu0
    %407 = vmatpush.msra.mxu0 %v379
    %408 = vmatpush.msra.mxu0 %v378
    %409 = vmatpush.msra.mxu0 %v377
    %410 = vmatpush.msra.mxu0 %v376
    %411 = vmatpush.msra.mxu0 %v375
    %412 = vmatpush.msra.mxu0 %v374
    %413 = vmatpush.msra.mxu0 %v373
    %414 = vmatpush.msra.mxu0 %v372
    %415 = vmatpush.msra.mxu0 %v371
    %416 = vmatpush.msra.mxu0 %v370
    %417 = vmatpush.msra.mxu0 %v369
    %418 = vmatpush.msra.mxu0 %v368
    %419 = vmatpush.msra.mxu0 %v367
    %420 = vmatpush.msra.mxu0 %v366
    %421 = vmatpush.msra.mxu0 %v365
    %422 = vmatpush.msra.mxu0 %v364
    %423 = vmatmul.f32.gmra.mxu0 %v345
    %v424 = vpop.f32.mrf.mxu0
    %v425 = vadd.f32 %v402, %v424
    %426 = vmatmul.f32.gmra.mxu0 %v347
    %v427 = vpop.f32.mrf.mxu0
    %v428 = vadd.f32 %v405, %v427
    %429 = vdwg.mxu0
    %430 = vst [vmem:[#allocation11] sm:$0xff] %v425
    %431 = vst [vmem:[#allocation11 + $0x8] sm:$0xff] %v428
    // Predicated region
    $region50: #{tpu_custom_call.1} parent=1 // pred_check
      _
    $region51: #{tpu_custom_call.1} parent=1 // pred_check_branch
      %433 = sbr.rel (0) target = $region53
    $region52: #{tpu_custom_call.1} parent=1 // pred_region
      %435 = vsyncadd [#allocation4], 0
      %s436 = sshll.u32 [#allocation11], 4
      %s437 = int_to_ptr.vmem [resolvable:$true] %s436
      %s438 = sshll.u32 %s7, 4
      %s439 = int_to_ptr.hbm [resolvable:$true] %s438
      %444 = dma.vmem_to_hbm [thread:$0]  %s437, 256, %s439, [#allocation4], 128, 128, 8
    $region53: #{tpu_custom_call.1} parent=1 // pred_fallthru
      _
    // Predicated region
    $region54: #{tpu_custom_call.1} parent=1 // pred_check
      _
    $region55: #{tpu_custom_call.1} parent=1 // pred_check_branch
      %446 = sbr.rel (0) target = $region57
    $region56: #{tpu_custom_call.1} parent=1 // pred_region
      %448 = dma.done [#allocation4], 256
    $region57: #{tpu_custom_call.1} parent=1 // pred_fallthru
      _
    %449 = vsyncpa [#allocation3], 1
    %450 = vsyncpa [#allocation6], 1
    %451 = vsyncpa [#allocation9], 1
    %452 = vsyncpa [#allocation4], 1

</llo_original>
